<compile_context>
chip_gen: v5e
topology: v5e:2x2
jax: 0.10.0
libtpu: 0.0.40
codegen_flags: <defaults>
</compile_context>

<pallas_src>
import math

import jax
import jax.numpy as jnp
from jax.experimental import pallas as pl
from jax.experimental.pallas import tpu as pltpu


def make_sinusoidal_pos_emb(d_model: int, max_len: int = 2048) -> jnp.ndarray:
    """Deterministic buffer, identical to the PyTorch register_buffer 'pos_emb'
    (minus the leading broadcast dim of size 1)."""
    assert d_model > 3 and d_model % 2 == 0
    position = jnp.arange(max_len, dtype=jnp.float32)[:, None]            # [max_len, 1]
    div_term = jnp.exp(
        jnp.arange(0, d_model, 2, dtype=jnp.float32) * (-math.log(10000.0) / d_model)
    )                                                                     # [d_model//2]
    angles = position * div_term                                          # [max_len, d_model//2]
    pos_emb = jnp.zeros((max_len, d_model), dtype=jnp.float32)
    pos_emb = pos_emb.at[:, 0::2].set(jnp.sin(angles))
    pos_emb = pos_emb.at[:, 1::2].set(jnp.cos(angles))
    return pos_emb                                                        # [max_len, d_model]


def _add_pos_emb_kernel_2d(x_ref, pe_ref, o_ref):
    # Batch dim squeezed out by the BlockSpec: all refs are (TS, d_model).
    # Straight VPU add, no broadcast, explicit cast to the output dtype.
    o_ref[...] = (x_ref[...] + pe_ref[...]).astype(o_ref.dtype)


def _add_pos_emb_kernel_3d(x_ref, pe_ref, o_ref):
    # Tiny-slab path: x_ref/o_ref are (B_TILE, seq_len, d_model), pe_ref is
    # (seq_len, d_model); one broadcast per grid step (few steps by design).
    o_ref[...] = (x_ref[...] + pe_ref[...][None, :, :]).astype(o_ref.dtype)


def _default_tile_bytes() -> int:
    """Generation-aware block size for this pure HBM-streaming kernel."""
    try:
        kind = jax.devices()[0].device_kind.lower()
    except Exception:  # pragma: no cover - conservative fallback
        kind = ""
    if "v7" in kind:
        # 3.2 TB/s HBM: a 1 MiB block streams in ~0.3 us, i.e. the same order
        # as the ~0.35 us/step overhead -> use larger blocks on v7x.
        return 6 << 20
    # v5e / v6e / unknown: 4 MiB sits on the measured 85-86% roofline plateau.
    return 4 << 20


def _choose_seq_tile(seq_len: int, d_model: int, itemsize: int,
                     target_tile_bytes: int) -> int:
    row_bytes = d_model * itemsize
    if seq_len * row_bytes <= target_tile_bytes:
        return seq_len                       # full-extent block: always legal
    # sublane multiple: 8 rows for f32, 16 for bf16, 32 for 8-bit dtypes
    sublane = max(8, 32 // itemsize)
    ts = (target_tile_bytes // row_bytes) // sublane * sublane
    ts = max(sublane, ts)
    return min(ts, seq_len)


def sinusoidal_positional_encoding(x: jnp.ndarray, pos_emb: jnp.ndarray,
                                   *, target_tile_bytes: int | None = None,
                                   donate_x: bool = False) -> jnp.ndarray:
    """x: [batch, seq_len, d_model]; pos_emb: [max_len, d_model] -> x + pos_emb[:seq_len].

    donate_x=True adds input_output_aliases={0: 0} (write result into x's
    buffer); only use when the caller does not need x afterwards.
    """
    batch, seq_len, d_model = x.shape
    # Buffer-setup glue (== pos_emb[:, :seq_len, :] in PyTorch).  pe is cast
    # to x.dtype so pe DMA bytes and the add stay in x.dtype; for bf16 this
    # adds one extra rounding of pe vs an f32 add + cast-of-the-sum.
    pe = pos_emb[:seq_len, :].astype(x.dtype)

    if target_tile_bytes is None:
        target_tile_bytes = _default_tile_bytes()

    # --- lane-dense fold: keep the lane (last) axis a multiple of 128 -------
    # Reshape [B, S, D] -> [B, S//k, k*D] (free row-major view) so stores are
    # unmasked lane-dense vst even when d_model is 64/96/etc.
    k = 1
    if d_model % 128 != 0:
        k0 = 128 // math.gcd(d_model, 128)
        if k0 > 1 and seq_len % k0 == 0:
            k = k0
    s_w, d_w = seq_len // k, d_model * k
    x_w = x.reshape(batch, s_w, d_w)
    pe_w = pe.reshape(s_w, d_w)

    itemsize = jnp.dtype(x.dtype).itemsize
    out_shape = jax.ShapeDtypeStruct((batch, s_w, d_w), x.dtype)
    slab_bytes = s_w * d_w * itemsize

    # Scoped-VMEM budget: x, pe, out tiles, each double-buffered (~6 tiles),
    # plus headroom.  Set explicitly so v5e's 16 MiB scoped default does not
    # cap the tile sweep; stays well under physical VMEM on all generations.
    vmem_limit = int(min(6 * target_tile_bytes + (8 << 20), 48 << 20))
    io_aliases = {0: 0} if donate_x else {}

    # --- tiny-slab path: fold batch elements into one block -----------------
    if batch > 1 and 2 * slab_bytes <= target_tile_bytes:
        b_tile = int(min(batch, max(2, target_tile_bytes // slab_bytes)))
        # Keep >=2 grid steps (>=8 for large batch) when batch allows: a
        # single step leaves one v7x TensorCore idle and removes all
        # DMA/compute overlap.
        target_steps = 8 if batch >= 16 else 2
        b_tile = max(1, min(b_tile, pl.cdiv(batch, target_steps)))
        out = pl.pallas_call(
            _add_pos_emb_kernel_3d,
            out_shape=out_shape,
            grid_spec=pltpu.PrefetchScalarGridSpec(
                num_scalar_prefetch=0,
                grid=(pl.cdiv(batch, b_tile),),
                in_specs=[
                    pl.BlockSpec((b_tile, s_w, d_w), lambda b: (b, 0, 0)),
                    pl.BlockSpec((s_w, d_w), lambda b: (0, 0)),
                ],
                out_specs=pl.BlockSpec((b_tile, s_w, d_w), lambda b: (b, 0, 0)),
            ),
            compiler_params=pltpu.CompilerParams(
                dimension_semantics=("parallel",),
                vmem_limit_bytes=vmem_limit,
            ),
            input_output_aliases=io_aliases,
        )(x_w, pe_w)
        return out.reshape(batch, seq_len, d_model)

    # --- general path: tile the sequence axis, squeeze the batch dim --------
    ts = _choose_seq_tile(s_w, d_w, itemsize, target_tile_bytes)
    n_seq_tiles = pl.cdiv(s_w, ts)

    # Grid ordered (seq_tiles, batch): pe's block index only changes on the
    # outer axis, so each pe tile is fetched once and reused for every batch
    # element; both axes are fully parallel (each output block written once).
    out = pl.pallas_call(
        _add_pos_emb_kernel_2d,
        out_shape=out_shape,
        grid_spec=pltpu.PrefetchScalarGridSpec(
            num_scalar_prefetch=0,
            grid=(n_seq_tiles, batch),
            in_specs=[
                pl.BlockSpec((None, ts, d_w), lambda s, b: (b, s, 0)),
                pl.BlockSpec((ts, d_w), lambda s, b: (s, 0)),
            ],
            out_specs=pl.BlockSpec((None, ts, d_w), lambda s, b: (b, s, 0)),
        ),
        compiler_params=pltpu.CompilerParams(
            dimension_semantics=("parallel", "parallel"),
            vmem_limit_bytes=vmem_limit,
        ),
        input_output_aliases=io_aliases,
    )(x_w, pe_w)
    return out.reshape(batch, seq_len, d_model)


if __name__ == "__main__":
    max_len = 2048
    key = jax.random.PRNGKey(0)
    k1, k2, k3 = jax.random.split(key, 3)

    # --- demo shape: lane-dense d_model (multiple of 128), tiny-slab path ---
    batch, seq_len, d_model = 2, 16, 128
    pos_emb = make_sinusoidal_pos_emb(d_model, max_len)
    x = jax.random.normal(k1, (batch, seq_len, d_model), dtype=jnp.float32)

    out = jax.block_until_ready(sinusoidal_positional_encoding(x, pos_emb))
    ref = x + pos_emb[None, :seq_len, :]
    assert out.shape == (batch, seq_len, d_model)
    assert jnp.allclose(out, ref, atol=1e-6), "f32 mismatch vs reference"

    # --- seq-tiled path with a ragged last tile (exercises 2-D kernel) ------
    b2, s2, d2 = 2, 200, 128
    pos_emb2 = make_sinusoidal_pos_emb(d2, max_len)
    x2 = jax.random.normal(k2, (b2, s2, d2), dtype=jnp.float32)
    out2 = jax.block_until_ready(
        sinusoidal_positional_encoding(x2, pos_emb2, target_tile_bytes=64 * 1024))
    ref2 = x2 + pos_emb2[None, :s2, :]
    assert jnp.allclose(out2, ref2, atol=1e-6), "tiled f32 mismatch vs reference"

    # --- bf16 activations: pe cast to bf16 in the wrapper --------------------
    x3 = x.astype(jnp.bfloat16)
    out3 = jax.block_until_ready(sinusoidal_positional_encoding(x3, pos_emb))
    ref3 = x3 + pos_emb[None, :seq_len, :].astype(jnp.bfloat16)
    assert out3.dtype == jnp.bfloat16
    assert jnp.allclose(out3.astype(jnp.float32), ref3.astype(jnp.float32),
                        atol=1e-2), "bf16 mismatch vs reference"

    # --- non-128 d_model: exercises the lane-dense fold (k = 4 here) ---------
    b4, s4, d4 = 2, 16, 96
    pos_emb4 = make_sinusoidal_pos_emb(d4, max_len)
    x4 = jax.random.normal(k3, (b4, s4, d4), dtype=jnp.float32)
    out4 = jax.block_until_ready(sinusoidal_positional_encoding(x4, pos_emb4))
    ref4 = x4 + pos_emb4[None, :s4, :]
    assert jnp.allclose(out4, ref4, atol=1e-6), "lane-fold f32 mismatch vs reference"

    print("KERNEL_OK")
</pallas_src>

<mosaic_0001>
module attributes {stable_mosaic.version = 11 : i64} {
  func.func @_add_pos_emb_kernel_3d(%arg0: i32, %arg1: memref<1x16x128xf32, #tpu.memory_space<vmem>>, %arg2: memref<16x128xf32, #tpu.memory_space<vmem>>, %arg3: memref<1x16x128xf32, #tpu.memory_space<vmem>>) attributes {dimension_semantics = [#tpu.dimension_semantics<parallel>], iteration_bounds = array<i64: 2>, scalar_prefetch = 0 : i64, scratch_operands = 0 : i64, tpu.core_type = #tpu.core_type<tc>, window_params = [{transform_indices = @transform_0, window_bounds = array<i64: 1, 16, 128>}, {pipeline_mode = #tpu.pipeline_mode<synchronous>, transform_indices = @transform_1, window_bounds = array<i64: 16, 128>}, {transform_indices = @transform_2, window_bounds = array<i64: 1, 16, 128>}]} {
    %c0 = arith.constant 0 : index
    %c0_0 = arith.constant 0 : index
    %c0_1 = arith.constant 0 : index
    %0 = vector.load %arg1[%c0, %c0_0, %c0_1] : memref<1x16x128xf32, #tpu.memory_space<vmem>>, vector<1x16x128xf32>
    %c0_2 = arith.constant 0 : index
    %c0_3 = arith.constant 0 : index
    %1 = vector.load %arg2[%c0_2, %c0_3] : memref<16x128xf32, #tpu.memory_space<vmem>>, vector<16x128xf32>
    %2 = vector.shape_cast %1 : vector<16x128xf32> to vector<1x16x128xf32>
    %3 = arith.addf %0, %2 : vector<1x16x128xf32>
    %c0_4 = arith.constant 0 : index
    %c0_5 = arith.constant 0 : index
    %c0_6 = arith.constant 0 : index
    %4 = vector.load %arg3[%c0_4, %c0_5, %c0_6] : memref<1x16x128xf32, #tpu.memory_space<vmem>>, vector<1x16x128xf32>
    tpu.vector_store %arg3[%c0_4, %c0_5, %c0_6], %3 {strides = array<i32>} : memref<1x16x128xf32, #tpu.memory_space<vmem>>, vector<1x16x128xf32>,
    return
  }
  func.func @transform_0(%arg0: i32) -> (i32, i32, i32) {
    %c0_i32 = arith.constant 0 : i32
    %c0_i32_0 = arith.constant 0 : i32
    %c0_i32_1 = arith.constant 0 : i32
    return %arg0, %c0_i32, %c0_i32_0 : i32, i32, i32
  }
  func.func @transform_1(%arg0: i32) -> (i32, i32) {
    %c0_i32 = arith.constant 0 : i32
    %c0_i32_0 = arith.constant 0 : i32
    %c0_i32_1 = arith.constant 0 : i32
    return %c0_i32, %c0_i32_0 : i32, i32
  }
  func.func @transform_2(%arg0: i32) -> (i32, i32, i32) {
    %c0_i32 = arith.constant 0 : i32
    %c0_i32_0 = arith.constant 0 : i32
    %c0_i32_1 = arith.constant 0 : i32
    return %arg0, %c0_i32, %c0_i32_0 : i32, i32, i32
  }
}

</mosaic_0001>

<llo_original>
// kernel: tpu_custom_call.1
$region0: #{tpu_custom_call.1}
  #allocation0 [shape = 'u32[]', space=smem, size = 0x4, offset = 0x4, fixed_abs, tag = 'smem constant byte address 0x4 - core index']
  #allocation1 [shape = 'u32[72,128]{1,0:T(1,128)}', space=vmem, size = 0x9000, scoped, tag = 'internal scratch']
  %s0 = inlined_call_operand.hbm [shape: f32[2,16,128], index: 0, kind: input, shape index: {}]
  %s1 = inlined_call_operand.hbm [shape: f32[16,128], index: 1, kind: input, shape index: {}]
  %s2 = inlined_call_operand.hbm [shape: f32[2,16,128], index: 2, kind: output, shape index: {}]
  %s3 = sld [smem:[#allocation0]]
  $region49: #{tpu_custom_call.1} parent=0
    _
  %s5 = ssub.s32 1, %s3
  %s6 = scalar_select 0, %s5, %s3
  $region1: #{tpu_custom_call.1} parent=0
    #allocation2 [shape = 'u8[16384]{0}', space=vmem, size = 0x4000, scoped, tag = 'input window, operand 0']
    #allocation3 [shape = 's32[2]{0}', space=sflag, size = 0x8, scoped, tag = 'scoped memory for tpu_custom_call.1']
    #allocation4 [shape = 's32[2]{0}', space=sflag, size = 0x8, scoped, tag = 'scoped memory for tpu_custom_call.1']
    #allocation5 [shape = 'u8[8192]{0}', space=vmem, size = 0x2000, scoped, tag = 'input window, operand 1, single buffered']
    #allocation6 [shape = 's32[1]{0}', space=sflag, size = 0x4, scoped, tag = 'scoped memory for tpu_custom_call.1']
    #allocation7 [shape = 'u8[16384]{0}', space=vmem, size = 0x4000, scoped, tag = 'output window, operand 0']
    %7 = vsyncpa [#allocation3], 0
    %s8 = scalar_lea.sflag [#allocation3], 1
    %9 = vsyncpa %s8, 0
    %10 = vsyncpa [#allocation6], 0
    %11 = vsyncpa [#allocation4], 0
    %s12 = scalar_lea.sflag [#allocation4], 1
    %13 = vsyncpa %s12, 0
    loop: start=0, step=1, limit=4
    $region2: #{tpu_custom_call.1} parent=1 // loop_pre_header
      _
    $region3: #{tpu_custom_call.1} parent=1 // loop_header
      %s15 = sphi 0, %s19
      %p16 = scmp.ge.s32.totalorder %s15, 4
      %s25 = sphi 0, %s27
      %s28 = sphi 0, %s25
      %s29 = sphi 0, %s28
      %s45 = sphi 0, %s29
      %s49 = sphi 0, %s49
      %s51 = sphi 0, %s49
      %s52 = sphi 0, %s51
      %s66 = sphi 0, %s52
      %s72 = sphi 0, %s74
      %s75 = sphi 0, %s72
      %s76 = sphi 0, %s75
      %s92 = sphi 0, %s76
    $region4: #{tpu_custom_call.1} parent=1 // loop_header_branch
      %18 = sbr.rel (%p16) target = $region8
    $region5: #{tpu_custom_call.1} parent=1 // loop_body
      %s20 = ssub.s32 %s15, 1
      %s21 = ssub.s32 %s15, 2
      %s22 = sadd.s32 %s15, 1
      %s23 = ssub.s32 %s15, %s22
      %p24 = scmp.eq.s32.totalorder %s23, 0
      %s26 = sadd.s32 %s25, 1
      %s27 = scalar_select %p24, %s25, %s26
      %p30 = pneg %p24
      %p31 = scmp.eq.s32.totalorder %s15, 1
      %p32 = por %p30, %p31
      %p33 = scmp.ne.s32.totalorder %s25, %s28
      %p34 = scmp.eq.s32.totalorder %s15, 0
      %p35 = por %p33, %p34
      %p36 = scmp.ne.s32.totalorder %s25, %s28
      %p37 = scmp.eq.s32.totalorder %s20, 1
      %p38 = por %p36, %p37
      %p39 = scmp.ne.s32.totalorder %s28, %s29
      %p40 = scmp.eq.s32.totalorder %s20, 0
      %p41 = por %p39, %p40
      %p42 = scmp.ne.s32.totalorder %s28, %s29
      %p43 = scmp.eq.s32.totalorder %s21, 1
      %p44 = por %p42, %p43
      %p46 = scmp.ne.s32.totalorder %s29, %s45
      %p47 = scmp.eq.s32.totalorder %s21, 0
      %p48 = por %p46, %p47
      %s50 = sadd.s32 %s49, 1
      %p53 = scmp.eq.s32.totalorder %s15, 1
      %p54 = scmp.ne.s32.totalorder %s49, %s51
      %p55 = scmp.eq.s32.totalorder %s15, 0
      %p56 = por %p54, %p55
      %p57 = scmp.ne.s32.totalorder %s49, %s51
      %p58 = scmp.eq.s32.totalorder %s20, 1
      %p59 = por %p57, %p58
      %p60 = scmp.ne.s32.totalorder %s51, %s52
      %p61 = scmp.eq.s32.totalorder %s20, 0
      %p62 = por %p60, %p61
      %p63 = scmp.ne.s32.totalorder %s51, %s52
      %p64 = scmp.eq.s32.totalorder %s21, 1
      %p65 = por %p63, %p64
      %p67 = scmp.ne.s32.totalorder %s52, %s66
      %p68 = scmp.eq.s32.totalorder %s21, 0
      %p69 = por %p67, %p68
      %s70 = ssub.s32 %s15, %s22
      %p71 = scmp.eq.s32.totalorder %s70, 0
      %s73 = sadd.s32 %s72, 1
      %s74 = scalar_select %p71, %s72, %s73
      %p77 = pneg %p71
      %p78 = scmp.eq.s32.totalorder %s15, 1
      %p79 = por %p77, %p78
      %p80 = scmp.ne.s32.totalorder %s72, %s75
      %p81 = scmp.eq.s32.totalorder %s15, 0
      %p82 = por %p80, %p81
      %p83 = scmp.ne.s32.totalorder %s72, %s75
      %p84 = scmp.eq.s32.totalorder %s20, 1
      %p85 = por %p83, %p84
      %p86 = scmp.ne.s32.totalorder %s75, %s76
      %p87 = scmp.eq.s32.totalorder %s20, 0
      %p88 = por %p86, %p87
      %p89 = scmp.ne.s32.totalorder %s75, %s76
      %p90 = scmp.eq.s32.totalorder %s21, 1
      %p91 = por %p89, %p90
      %p93 = scmp.ne.s32.totalorder %s76, %s92
      %p94 = scmp.eq.s32.totalorder %s21, 0
      %p95 = por %p93, %p94
      %p96 = scmp.le.s32.totalorder 1, %s15
      %p97 = scmp.lt.s32.totalorder %s15, 3
      %p98 = pnand %p96, %p97
      %p99 = pneg %p98
      // Predicated region
      $region9: #{tpu_custom_call.1} parent=5 // pred_check
        _
      $region10: #{tpu_custom_call.1} parent=5 // pred_check_branch
        %101 = sbr.rel (%p98) target = $region12
      $region11: #{tpu_custom_call.1} parent=5 // pred_region
        %s102 = ssub.s32 %s15, 1
        // Predicated region
        $region13: #{tpu_custom_call.1} parent=11 // pred_check
          %p103 = pneg %p62
        $region14: #{tpu_custom_call.1} parent=11 // pred_check_branch
          %105 = sbr.rel (%p103) target = $region16
        $region15: #{tpu_custom_call.1} parent=11 // pred_region
          %107 = vsyncadd [#allocation6], 0
          %s108 = sshll.u32 %s1, 4
          %s109 = int_to_ptr.hbm [resolvable:$true] %s108
          %s110 = sshll.u32 [#allocation5], 4
          %s111 = int_to_ptr.vmem [resolvable:$true] %s110
          %116 = dma.hbm_to_vmem [thread:$0]  %s109, 256, %s111, [#allocation6], 128, 128, 8
        $region16: #{tpu_custom_call.1} parent=11 // pred_fallthru
          _
      $region12: #{tpu_custom_call.1} parent=5 // pred_fallthru
        _
      %p117 = scmp.lt.s32.totalorder %s15, 2
      // Predicated region
      $region17: #{tpu_custom_call.1} parent=5 // pred_check
        %p118 = pneg %p117
      $region18: #{tpu_custom_call.1} parent=5 // pred_check_branch
        %120 = sbr.rel (%p118) target = $region20
      $region19: #{tpu_custom_call.1} parent=5 // pred_region
        // Predicated region
        $region21: #{tpu_custom_call.1} parent=19 // pred_check
          %p121 = pneg %p35
        $region22: #{tpu_custom_call.1} parent=19 // pred_check_branch
          %123 = sbr.rel (%p121) target = $region24
        $region23: #{tpu_custom_call.1} parent=19 // pred_region
          %s124 = sand.u32 %s25, 1
          %s125 = scalar_lea.sflag [#allocation3], %s124
          %s126 = sand.u32 %s25, 1
          %s127 = smul.addr %s126, 16
          %s128 = scalar_lea.vmem [#allocation2], %s127
          %130 = vsyncadd %s125, 0
          %s131 = smul.addr %s15, 2
          %s132 = smul.addr %s131, 8
          %s133 = scalar_lea.hbm %s0, %s132
          %s134 = sshll.u32 %s133, 4
          %s135 = int_to_ptr.hbm [resolvable:$true] %s134
          %s136 = sshll.u32 %s128, 4
          %s137 = int_to_ptr.vmem [resolvable:$true] %s136
          %142 = dma.hbm_to_vmem [thread:$0]  %s135, 256, %s137, %s125, 128, 128, 8
        $region24: #{tpu_custom_call.1} parent=19 // pred_fallthru
          _
      $region20: #{tpu_custom_call.1} parent=5 // pred_fallthru
        _
      %p143 = scmp.le.s32.totalorder 1, %s15
      %p144 = scmp.lt.s32.totalorder %s15, 3
      %p145 = pnand %p143, %p144
      %p146 = pneg %p145
      // Predicated region
      $region25: #{tpu_custom_call.1} parent=5 // pred_check
        _
      $region26: #{tpu_custom_call.1} parent=5 // pred_check_branch
        %148 = sbr.rel (%p145) target = $region28
      $region27: #{tpu_custom_call.1} parent=5 // pred_region
        %s149 = ssub.s32 %s15, 1
        %s150 = sand.u32 %s28, 1
        %s151 = scalar_lea.sflag [#allocation3], %s150
        %s152 = sand.u32 %s28, 1
        %s153 = smul.addr %s152, 16
        %s154 = scalar_lea.vmem [#allocation2], %s153
        // Predicated region
        $region29: #{tpu_custom_call.1} parent=27 // pred_check
          %p155 = pneg %p41
        $region30: #{tpu_custom_call.1} parent=27 // pred_check_branch
          %157 = sbr.rel (%p155) target = $region32
        $region31: #{tpu_custom_call.1} parent=27 // pred_region
          %159 = dma.done %s151, 256
        $region32: #{tpu_custom_call.1} parent=27 // pred_fallthru
          _
        // Predicated region
        $region33: #{tpu_custom_call.1} parent=27 // pred_check
          %p160 = pneg %p62
        $region34: #{tpu_custom_call.1} parent=27 // pred_check_branch
          %162 = sbr.rel (%p160) target = $region36
        $region35: #{tpu_custom_call.1} parent=27 // pred_region
          %164 = dma.done [#allocation6], 256
        $region36: #{tpu_custom_call.1} parent=27 // pred_fallthru
          _
        %s165 = sand.u32 %s28, 1
        %s166 = scalar_lea.sflag [#allocation3], %s165
        %s167 = sand.u32 %s28, 1
        %s168 = smul.addr %s167, 16
        %s169 = scalar_lea.vmem [#allocation2], %s168
        %p170 = pneg %p41
        %p171 = pneg %p38
        %p172 = pneg %p62
        %p173 = pneg %p59
        %p174 = pneg %p88
        %p175 = pneg %p85
        %s176 = sand.u32 %s75, 1
        %s177 = scalar_lea.sflag [#allocation4], %s176
        %s178 = sand.u32 %s75, 1
        %s179 = smul.addr %s178, 16
        %s180 = scalar_lea.vmem [#allocation7], %s179
        %v181 = vld [vmem:[%s154] sm:$0xff]
        %v182 = vld [vmem:[%s154 + $0x8] sm:$0xff]
        %v183 = vld [vmem:[#allocation5] sm:$0xff]
        %v184 = vld [vmem:[#allocation5 + $0x8] sm:$0xff]
        %v185 = vadd.f32 %v181, %v183
        %v186 = vadd.f32 %v182, %v184
        %187 = vst [vmem:[%s180] sm:$0xff] %v185
        %188 = vst [vmem:[%s180 + $0x8] sm:$0xff] %v186
        %s189 = sand.u32 %s75, 1
        %s190 = scalar_lea.sflag [#allocation4], %s189
        %s191 = sand.u32 %s75, 1
        %s192 = smul.addr %s191, 16
        %s193 = scalar_lea.vmem [#allocation7], %s192
        // Predicated region
        $region37: #{tpu_custom_call.1} parent=27 // pred_check
          %p194 = pneg %p85
        $region38: #{tpu_custom_call.1} parent=27 // pred_check_branch
          %196 = sbr.rel (%p194) target = $region40
        $region39: #{tpu_custom_call.1} parent=27 // pred_region
          %198 = vsyncadd %s190, 0
          %s199 = smul.addr %s20, 2
          %s200 = smul.addr %s199, 8
          %s201 = scalar_lea.hbm %s2, %s200
          %s202 = sshll.u32 %s193, 4
          %s203 = int_to_ptr.vmem [resolvable:$true] %s202
          %s204 = sshll.u32 %s201, 4
          %s205 = int_to_ptr.hbm [resolvable:$true] %s204
          %210 = dma.vmem_to_hbm [thread:$0]  %s203, 256, %s205, %s190, 128, 128, 8
        $region40: #{tpu_custom_call.1} parent=27 // pred_fallthru
          _
      $region28: #{tpu_custom_call.1} parent=5 // pred_fallthru
        _
      %p211 = scmp.le.s32.totalorder 2, %s15
      // Predicated region
      $region41: #{tpu_custom_call.1} parent=5 // pred_check
        %p212 = pneg %p211
      $region42: #{tpu_custom_call.1} parent=5 // pred_check_branch
        %214 = sbr.rel (%p212) target = $region44
      $region43: #{tpu_custom_call.1} parent=5 // pred_region
        %s215 = ssub.s32 %s15, 2
        // Predicated region
        $region45: #{tpu_custom_call.1} parent=43 // pred_check
          %p216 = pneg %p91
        $region46: #{tpu_custom_call.1} parent=43 // pred_check_branch
          %218 = sbr.rel (%p216) target = $region48
        $region47: #{tpu_custom_call.1} parent=43 // pred_region
          %s219 = sand.u32 %s76, 1
          %s220 = scalar_lea.sflag [#allocation4], %s219
          %s221 = sand.u32 %s76, 1
          %s222 = smul.addr %s221, 16
          %s223 = scalar_lea.vmem [#allocation7], %s222
          %225 = dma.done %s220, 256
        $region48: #{tpu_custom_call.1} parent=43 // pred_fallthru
          _
      $region44: #{tpu_custom_call.1} parent=5 // pred_fallthru
        _
    $region6: #{tpu_custom_call.1} parent=1 // loop_footer
      %s19 = sadd.s32 1, %s15
    $region7: #{tpu_custom_call.1} parent=1 // loop_footer_branch
      %14 = sbr.rel target = $region3
    $region8: #{tpu_custom_call.1} parent=1 // loop_exit
      _
    %226 = vsyncpa [#allocation3], 1
    %s227 = scalar_lea.sflag [#allocation3], 1
    %228 = vsyncpa %s227, 1
    %229 = vsyncpa [#allocation6], 1
    %230 = vsyncpa [#allocation4], 1
    %s231 = scalar_lea.sflag [#allocation4], 1
    %232 = vsyncpa %s231, 1

</llo_original>
